<compile_context>
chip_gen: v7x
topology: tpu7x:2x2x1
jax: 0.10.0
libtpu: 0.0.40
codegen_flags: <defaults>
</compile_context>

<pallas_src>
import functools

import numpy as np
import jax
import jax.numpy as jnp
from jax.experimental import pallas as pl
from jax.experimental.pallas import tpu as pltpu


LANE = 128  # lane-group width used for column-group alignment


# ----------------------------- kernel -----------------------------

def egret_fused_kernel(x_ref, ea_ref, src_ref, dst_ref, dstT_ref,
                       wn_ref, bn_ref, we_ref, be_ref, exp_ref,
                       out_ref, alpha_ref, *, hdp, lane):
    HDp, P = hdp, lane

    # Fused node transform: [N, HDp + 2P] = [ z (all heads, 0-padded) | a_j cols | a_i cols ]
    z_all = (jnp.dot(x_ref[...], wn_ref[...], preferred_element_type=jnp.float32)
             + bn_ref[...])
    # Fused edge transform: [E, HDp + P] = [ fc_edge(fc_edge_att(e)) | a_e cols + attn bias ]
    e_all = (jnp.dot(ea_ref[...], we_ref[...], preferred_element_type=jnp.float32)
             + be_ref[...])

    # Gather node rows onto edges via one-hot matmuls.  One-hot operands are bf16
    # (exact for 0/1); data side stays f32; f32 accumulation on the MXU.
    # Source gather touches only the z + a_j column groups; destination gather touches
    # only the a_i group (do NOT contract dst against the full z_all).
    g_src = jnp.dot(src_ref[...], z_all[:, :HDp + P],
                    preferred_element_type=jnp.float32)          # [E, HDp + P]
    a_i = jnp.dot(dst_ref[...], z_all[:, HDp + P:],
                  preferred_element_type=jnp.float32)            # [E, P]

    z_src = g_src[:, :HDp]          # x_j (fc output at source), [E, HDp]   (128-aligned)
    a_j = g_src[:, HDp:]            # attn_fc x_j contribution,  [E, P]     (128-aligned)
    ez = e_all[:, :HDp]             # fc_edge(edge_attr'),       [E, HDp]
    a_e = e_all[:, HDp:]            # attn_fc edge contrib+bias, [E, P]

    # Attention logits for all heads live in lanes 0..H-1; pad lanes are exactly 0 and
    # never influence real lanes (all following ops are column-wise independent).
    a = a_i + a_j + a_e                         # [E, P]
    e = jnp.where(a > 0, a, 0.2 * a)            # leaky_relu(negative_slope=0.2)

    # Per-destination softmax with a per-column global shift (shift-invariant within each
    # destination group -> identical to the per-group max shift); no [E, N] temporaries.
    m = jnp.max(e, axis=0, keepdims=True)       # [1, P]
    ex = jnp.exp(e - m)                         # [E, P]  (f32)
    den = jnp.dot(dstT_ref[...], ex, preferred_element_type=jnp.float32)    # [N, P]
    den_e = jnp.dot(dst_ref[...], den, preferred_element_type=jnp.float32)  # [E, P]
    alpha = ex * pl.reciprocal(den_e, approx=True)                          # [E, P]

    # Broadcast per-head alpha over each head's Dout block with one tiny MXU matmul
    # (replaces the per-head slice/broadcast/concat loop -> no sub-tile lane relayouts).
    alpha_wide = jnp.dot(alpha, exp_ref[...],
                         preferred_element_type=jnp.float32)     # [E, HDp]
    msg = alpha_wide * (z_src + ez)                               # [E, HDp]

    # Scatter-add to destination nodes; result is already head-concatenated (merge='cat')
    # and lane-dense (HDp is a multiple of 128; pad columns are exactly zero).
    out_ref[...] = jnp.dot(dstT_ref[...], msg,
                           preferred_element_type=jnp.float32)    # [N, HDp]
    # Natural lane-dense layout; head slice + transpose handled in the wrapper.
    alpha_ref[...] = alpha                                        # [E, P]


# ----------------------------- host-side weight fusion -----------------------------

def _round_up(x, m):
    return ((x + m - 1) // m) * m


def fuse_params(p):
    """Compose per-head weights into two wide, 128-lane-group-aligned matmuls."""
    H, Din, Dout = p["wfc"].shape
    De = p["weatt"].shape[1]
    HD = H * Dout
    HDp = _round_up(HD, LANE)
    assert H <= LANE, "heads must fit one lane group"

    f32 = jnp.float32
    # node side: [ z (heads, zero-padded to HDp) | a_j group (P) | a_i group (P) ]
    w_node = jnp.zeros((Din, HDp + 2 * LANE), f32)
    b_node = jnp.zeros((1, HDp + 2 * LANE), f32)
    # edge side: [ fc_edge(fc_edge_for_att_calc(.)) heads (HDp) | a_e group (P) ]
    w_edge = jnp.zeros((De, HDp + LANE), f32)
    b_edge = jnp.zeros((1, HDp + LANE), f32)
    # expander: row h has ones over that head's Dout block (rows >= H are zero)
    expander = jnp.zeros((LANE, HDp), f32)

    for h in range(H):
        lo, hi = h * Dout, (h + 1) * Dout
        w_node = w_node.at[:, lo:hi].set(p["wfc"][h])
        b_node = b_node.at[:, lo:hi].set(p["bfc"][h])
        w_node = w_node.at[:, HDp + h].set((p["wfc"][h] @ p["waj"][h])[:, 0])
        b_node = b_node.at[:, HDp + h].set((p["bfc"][h] @ p["waj"][h])[:, 0])
        w_node = w_node.at[:, HDp + LANE + h].set((p["wfc"][h] @ p["wai"][h])[:, 0])
        b_node = b_node.at[:, HDp + LANE + h].set((p["bfc"][h] @ p["wai"][h])[:, 0])

        w_edge = w_edge.at[:, lo:hi].set(p["weatt"][h] @ p["wedge"][h])
        b_edge = b_edge.at[:, lo:hi].set(p["beatt"][h] @ p["wedge"][h] + p["bedge"][h])
        w_edge = w_edge.at[:, HDp + h].set((p["weatt"][h] @ p["wae"][h])[:, 0])
        b_edge = b_edge.at[:, HDp + h].set((p["beatt"][h] @ p["wae"][h] + p["ba"][h])[:, 0])

        expander = expander.at[h, lo:hi].set(1.0)

    return w_node, b_node, w_edge, b_edge, expander, HDp


def _vmem_limit_bytes():
    # Leave headroom below physical VMEM (v7x TensorCore has only 64 MiB and full-array
    # BlockSpecs are double-buffered by default); derive per-generation when possible.
    try:
        cap = pltpu.get_tpu_info().vmem_capacity_bytes
    except Exception:  # pragma: no cover - conservative fallback
        cap = 128 * 1024 * 1024
    return int(min(48 * 1024 * 1024, (cap * 3) // 4))


# ----------------------------- wrapper -----------------------------

def multi_head_egret(x, edge_index, edge_attr, params):
    N, Din = x.shape
    E, De = edge_attr.shape
    H, _, Dout = params["wfc"].shape
    HD = H * Dout

    w_node, b_node, w_edge, b_edge, expander, HDp = fuse_params(params)

    # bf16 one-hot gather/scatter operands: 0/1 is exact in bf16 and halves the [E,N]
    # footprint; all data-side operands stay f32 (accuracy per review).
    src_oh = jax.nn.one_hot(edge_index[0], N, dtype=jnp.bfloat16)   # [E, N]
    dst_oh = jax.nn.one_hot(edge_index[1], N, dtype=jnp.bfloat16)   # [E, N]
    dst_oh_T = dst_oh.T                                             # [N, E]

    kernel = functools.partial(egret_fused_kernel, hdp=HDp, lane=LANE)
    full = lambda shape: pl.BlockSpec(shape, lambda i: (0, 0))

    # TODO(synk): once the edge-tiled rewrite lands, the edge-tile grid axis should be
    # marked "parallel" (megacore split on v7x) and input buffering tuned per tile.
    out_full, alpha_full = pl.pallas_call(
        kernel,
        grid=(1,),   # all heads fused; single invocation at these sizes
        in_specs=[
            full((N, Din)), full((E, De)),
            full((E, N)), full((E, N)), full((N, E)),
            full((Din, HDp + 2 * LANE)), full((1, HDp + 2 * LANE)),
            full((De, HDp + LANE)), full((1, HDp + LANE)),
            full((LANE, HDp)),
        ],
        out_specs=[
            full((N, HDp)),    # head-concatenated, lane-dense (128-multiple last dim)
            full((E, LANE)),   # alpha, lane-dense; heads in lanes 0..H-1
        ],
        out_shape=[
            jax.ShapeDtypeStruct((N, HDp), jnp.float32),
            jax.ShapeDtypeStruct((E, LANE), jnp.float32),
        ],
        compiler_params=pltpu.CompilerParams(
            dimension_semantics=("arbitrary",),
            vmem_limit_bytes=_vmem_limit_bytes(),
        ),
    )(x, edge_attr, src_oh, dst_oh, dst_oh_T, w_node, b_node, w_edge, b_edge, expander)

    # Wrapper-side layout plumbing only (slice off zero pad columns / pad lanes).
    merged = out_full[:, :HD]            # [N, H*Dout]
    alpha = alpha_full[:, :H].T          # [H, E]
    return merged, alpha


# ---------------- deterministic parameter init (synthetic, PyTorch-style) ----------------

def _xavier_normal(key, fan_out, fan_in, gain):
    std = gain * np.sqrt(2.0 / (fan_in + fan_out))
    return (std * jax.random.normal(key, (fan_out, fan_in))).astype(jnp.float32)


def _linear_bias(key, fan_in, shape):
    bound = 1.0 / np.sqrt(fan_in)
    return jax.random.uniform(key, shape, jnp.float32, -bound, bound)


def init_params(key, H, Din, Dout, De):
    gain = float(np.sqrt(2.0))  # calculate_gain('relu')
    wfc, bfc, weatt, beatt, wedge, bedge = [], [], [], [], [], []
    wai, waj, wae, ba = [], [], [], []
    for h in range(H):
        ks = jax.random.split(jax.random.fold_in(key, h), 8)
        w_fc = _xavier_normal(ks[0], Dout, Din, gain)              # [Dout, Din]
        w_att = _xavier_normal(ks[1], 1, 2 * Dout + De, gain)      # [1, 2Dout+De]
        w_edge = _xavier_normal(ks[2], Dout, De, gain)             # [Dout, De]
        w_eatt = _xavier_normal(ks[3], De, De, gain)               # [De, De]
        wfc.append(w_fc.T)                                         # [Din, Dout]
        bfc.append(_linear_bias(ks[4], Din, (1, Dout)))
        weatt.append(w_eatt.T)                                     # [De, De]
        beatt.append(_linear_bias(ks[5], De, (1, De)))
        wedge.append(w_edge.T)                                     # [De, Dout]
        bedge.append(_linear_bias(ks[6], De, (1, Dout)))
        wai.append(w_att[:, :Dout].T)                              # [Dout, 1]  (x_i part)
        waj.append(w_att[:, Dout:2 * Dout].T)                      # [Dout, 1]  (x_j part)
        wae.append(w_att[:, 2 * Dout:].T)                          # [De, 1]    (edge part)
        ba.append(_linear_bias(ks[7], 2 * Dout + De, (1, 1)))
    stk = lambda xs: jnp.stack(xs, axis=0)
    return dict(wfc=stk(wfc), bfc=stk(bfc), weatt=stk(weatt), beatt=stk(beatt),
                wedge=stk(wedge), bedge=stk(bedge),
                wai=stk(wai), waj=stk(waj), wae=stk(wae), ba=stk(ba))


# ---------------- pure-JAX reference (per-head, uncomposed weights) ----------------

def reference(x, edge_index, edge_attr, params):
    src, dst = edge_index[0], edge_index[1]
    N = x.shape[0]
    H = params["wfc"].shape[0]
    outs, alphas = [], []
    for h in range(H):
        z = x @ params["wfc"][h] + params["bfc"][h][0]
        et = edge_attr @ params["weatt"][h] + params["beatt"][h][0]
        a = (z[dst] @ params["wai"][h] + z[src] @ params["waj"][h]
             + et @ params["wae"][h] + params["ba"][h][0])          # [E,1]
        e = jnp.where(a > 0, a, 0.2 * a)[:, 0]
        m = jax.ops.segment_max(e, dst, num_segments=N)
        ex = jnp.exp(e - m[dst])
        den = jax.ops.segment_sum(ex, dst, num_segments=N)
        alpha = ex / den[dst]
        ez = et @ params["wedge"][h] + params["bedge"][h][0]
        msg = alpha[:, None] * (z[src] + ez)
        out = jax.ops.segment_sum(msg, dst, num_segments=N)
        outs.append(out)
        alphas.append(alpha)
    return jnp.concatenate(outs, axis=1), jnp.stack(alphas)   # [N, H*Dout], [H, E]


if __name__ == "__main__":
    # Small shapes: N=8 nodes, E=16 edges, in_dim=32, out_dim=32, edge_dim=16, 2 heads.
    N, E, Din, Dout, De, H = 8, 16, 32, 32, 16, 2

    key = jax.random.PRNGKey(0)
    kx, ke, ks, kd, kp = jax.random.split(key, 5)
    x = jax.random.normal(kx, (N, Din), jnp.float32)
    edge_attr = jax.random.normal(ke, (E, De), jnp.float32)
    edge_index = jnp.stack([
        jax.random.randint(ks, (E,), 0, N),   # source (x_j)
        jax.random.randint(kd, (E,), 0, N),   # destination (x_i, softmax index)
    ]).astype(jnp.int32)

    # Out-of-range indices would be silently dropped by the one-hot gather/scatter.
    ei_np = np.asarray(edge_index)
    assert (ei_np >= 0).all() and (ei_np < N).all(), "edge_index out of range"

    params = init_params(kp, H, Din, Dout, De)

    merged, alpha = multi_head_egret(x, edge_index, edge_attr, params)
    merged = jax.block_until_ready(merged)
    alpha = jax.block_until_ready(alpha)

    ref_merged, ref_alpha = reference(x, edge_index, edge_attr, params)
    assert merged.shape == (N, H * Dout), merged.shape
    assert alpha.shape == (H, E), alpha.shape
    # Residual error is dominated by the approximate EUP reciprocal in the softmax
    # normalization (everything else is f32 with exact bf16 one-hot operands).
    np.testing.assert_allclose(np.asarray(alpha), np.asarray(ref_alpha),
                               rtol=2e-2, atol=2e-2)
    np.testing.assert_allclose(np.asarray(merged), np.asarray(ref_merged),
                               rtol=2e-2, atol=5e-2)
    print("KERNEL_OK")
</pallas_src>

<mosaic_0001>
module attributes {stable_mosaic.version = 11 : i64} {
  func.func @egret_fused_kernel(%arg0: i32, %arg1: memref<8x32xf32, #tpu.memory_space<vmem>>, %arg2: memref<16x16xf32, #tpu.memory_space<vmem>>, %arg3: memref<16x8xbf16, #tpu.memory_space<vmem>>, %arg4: memref<16x8xbf16, #tpu.memory_space<vmem>>, %arg5: memref<8x16xbf16, #tpu.memory_space<vmem>>, %arg6: memref<32x384xf32, #tpu.memory_space<vmem>>, %arg7: memref<1x384xf32, #tpu.memory_space<vmem>>, %arg8: memref<16x256xf32, #tpu.memory_space<vmem>>, %arg9: memref<1x256xf32, #tpu.memory_space<vmem>>, %arg10: memref<128x128xf32, #tpu.memory_space<vmem>>, %arg11: memref<8x128xf32, #tpu.memory_space<vmem>>, %arg12: memref<16x128xf32, #tpu.memory_space<vmem>>) attributes {dimension_semantics = [#tpu.dimension_semantics<arbitrary>], iteration_bounds = array<i64: 1>, scalar_prefetch = 0 : i64, scratch_operands = 0 : i64, tpu.core_type = #tpu.core_type<tc>, window_params = [{pipeline_mode = #tpu.pipeline_mode<synchronous>, transform_indices = @transform_0, window_bounds = array<i64: 8, 32>}, {pipeline_mode = #tpu.pipeline_mode<synchronous>, transform_indices = @transform_1, window_bounds = array<i64: 16, 16>}, {pipeline_mode = #tpu.pipeline_mode<synchronous>, transform_indices = @transform_2, window_bounds = array<i64: 16, 8>}, {pipeline_mode = #tpu.pipeline_mode<synchronous>, transform_indices = @transform_3, window_bounds = array<i64: 16, 8>}, {pipeline_mode = #tpu.pipeline_mode<synchronous>, transform_indices = @transform_4, window_bounds = array<i64: 8, 16>}, {pipeline_mode = #tpu.pipeline_mode<synchronous>, transform_indices = @transform_5, window_bounds = array<i64: 32, 384>}, {pipeline_mode = #tpu.pipeline_mode<synchronous>, transform_indices = @transform_6, window_bounds = array<i64: 1, 384>}, {pipeline_mode = #tpu.pipeline_mode<synchronous>, transform_indices = @transform_7, window_bounds = array<i64: 16, 256>}, {pipeline_mode = #tpu.pipeline_mode<synchronous>, transform_indices = @transform_8, window_bounds = array<i64: 1, 256>}, {pipeline_mode = #tpu.pipeline_mode<synchronous>, transform_indices = @transform_9, window_bounds = array<i64: 128, 128>}, {pipeline_mode = #tpu.pipeline_mode<synchronous>, transform_indices = @transform_10, window_bounds = array<i64: 8, 128>}, {pipeline_mode = #tpu.pipeline_mode<synchronous>, transform_indices = @transform_11, window_bounds = array<i64: 16, 128>}]} {
    %c0 = arith.constant 0 : index
    %c0_0 = arith.constant 0 : index
    %0 = vector.load %arg1[%c0, %c0_0] : memref<8x32xf32, #tpu.memory_space<vmem>>, vector<8x32xf32>
    %c0_1 = arith.constant 0 : index
    %c0_2 = arith.constant 0 : index
    %1 = vector.load %arg6[%c0_1, %c0_2] : memref<32x384xf32, #tpu.memory_space<vmem>>, vector<32x384xf32>
    %cst = arith.constant dense<0.000000e+00> : vector<8x384xf32>
    %2 = tpu.matmul %0, %1, %cst {dimension_numbers = #tpu.dot_dimension_numbers<[1], [0], [0], [1], [0, 0, 1, 1], [], []>} : vector<8x32xf32>, vector<32x384xf32>, vector<8x384xf32> -> vector<8x384xf32>
    %c0_3 = arith.constant 0 : index
    %c0_4 = arith.constant 0 : index
    %3 = vector.load %arg7[%c0_3, %c0_4] : memref<1x384xf32, #tpu.memory_space<vmem>>, vector<1x384xf32>
    %4 = vector.broadcast %3 : vector<1x384xf32> to vector<8x384xf32>
    %5 = arith.addf %2, %4 : vector<8x384xf32>
    %c0_5 = arith.constant 0 : index
    %c0_6 = arith.constant 0 : index
    %6 = vector.load %arg2[%c0_5, %c0_6] : memref<16x16xf32, #tpu.memory_space<vmem>>, vector<16x16xf32>
    %c0_7 = arith.constant 0 : index
    %c0_8 = arith.constant 0 : index
    %7 = vector.load %arg8[%c0_7, %c0_8] : memref<16x256xf32, #tpu.memory_space<vmem>>, vector<16x256xf32>
    %cst_9 = arith.constant dense<0.000000e+00> : vector<16x256xf32>
    %8 = tpu.matmul %6, %7, %cst_9 {dimension_numbers = #tpu.dot_dimension_numbers<[1], [0], [0], [1], [0, 0, 1, 1], [], []>} : vector<16x16xf32>, vector<16x256xf32>, vector<16x256xf32> -> vector<16x256xf32>
    %c0_10 = arith.constant 0 : index
    %c0_11 = arith.constant 0 : index
    %9 = vector.load %arg9[%c0_10, %c0_11] : memref<1x256xf32, #tpu.memory_space<vmem>>, vector<1x256xf32>
    %10 = vector.broadcast %9 : vector<1x256xf32> to vector<16x256xf32>
    %11 = arith.addf %8, %10 : vector<16x256xf32>
    %c0_12 = arith.constant 0 : index
    %c0_13 = arith.constant 0 : index
    %12 = vector.load %arg3[%c0_12, %c0_13] : memref<16x8xbf16, #tpu.memory_space<vmem>>, vector<16x8xbf16>
    %13 = vector.extract_strided_slice %5 {offsets = [0, 0], sizes = [8, 256], strides = [1, 1]} : vector<8x384xf32> to vector<8x256xf32>
    %cst_14 = arith.constant dense<0.000000e+00> : vector<16x256xf32>
    %14 = tpu.matmul %12, %13, %cst_14 {dimension_numbers = #tpu.dot_dimension_numbers<[1], [0], [0], [1], [0, 0, 1, 1], [], []>} : vector<16x8xbf16>, vector<8x256xf32>, vector<16x256xf32> -> vector<16x256xf32>
    %c0_15 = arith.constant 0 : index
    %c0_16 = arith.constant 0 : index
    %15 = vector.load %arg4[%c0_15, %c0_16] : memref<16x8xbf16, #tpu.memory_space<vmem>>, vector<16x8xbf16>
    %16 = vector.extract_strided_slice %5 {offsets = [0, 256], sizes = [8, 128], strides = [1, 1]} : vector<8x384xf32> to vector<8x128xf32>
    %cst_17 = arith.constant dense<0.000000e+00> : vector<16x128xf32>
    %17 = tpu.matmul %15, %16, %cst_17 {dimension_numbers = #tpu.dot_dimension_numbers<[1], [0], [0], [1], [0, 0, 1, 1], [], []>} : vector<16x8xbf16>, vector<8x128xf32>, vector<16x128xf32> -> vector<16x128xf32>
    %18 = vector.extract_strided_slice %14 {offsets = [0, 0], sizes = [16, 128], strides = [1, 1]} : vector<16x256xf32> to vector<16x128xf32>
    %19 = vector.extract_strided_slice %14 {offsets = [0, 128], sizes = [16, 128], strides = [1, 1]} : vector<16x256xf32> to vector<16x128xf32>
    %20 = vector.extract_strided_slice %11 {offsets = [0, 0], sizes = [16, 128], strides = [1, 1]} : vector<16x256xf32> to vector<16x128xf32>
    %21 = vector.extract_strided_slice %11 {offsets = [0, 128], sizes = [16, 128], strides = [1, 1]} : vector<16x256xf32> to vector<16x128xf32>
    %22 = arith.addf %17, %19 : vector<16x128xf32>
    %23 = arith.addf %22, %21 : vector<16x128xf32>
    %cst_18 = arith.constant 0.000000e+00 : f32
    %24 = vector.broadcast %cst_18 : f32 to vector<16x128xf32>
    %25 = arith.cmpf ogt, %23, %24 : vector<16x128xf32>
    %cst_19 = arith.constant 2.000000e-01 : f32
    %26 = vector.broadcast %cst_19 : f32 to vector<16x128xf32>
    %27 = arith.mulf %26, %23 : vector<16x128xf32>
    %28 = arith.select %25, %23, %27 : vector<16x128xi1>, vector<16x128xf32>
    %cst_20 = arith.constant dense<0xFF800000> : vector<128xf32>
    %29 = vector.multi_reduction <maximumf>, %28, %cst_20 [0] : vector<16x128xf32> to vector<128xf32>
    %30 = vector.shape_cast %29 : vector<128xf32> to vector<1x128xf32>
    %31 = vector.broadcast %30 : vector<1x128xf32> to vector<16x128xf32>
    %32 = arith.subf %28, %31 : vector<16x128xf32>
    %33 = math.exp %32 : vector<16x128xf32>
    %c0_21 = arith.constant 0 : index
    %c0_22 = arith.constant 0 : index
    %34 = vector.load %arg5[%c0_21, %c0_22] : memref<8x16xbf16, #tpu.memory_space<vmem>>, vector<8x16xbf16>
    %cst_23 = arith.constant dense<0.000000e+00> : vector<8x128xf32>
    %35 = tpu.matmul %34, %33, %cst_23 {dimension_numbers = #tpu.dot_dimension_numbers<[1], [0], [0], [1], [0, 0, 1, 1], [], []>} : vector<8x16xbf16>, vector<16x128xf32>, vector<8x128xf32> -> vector<8x128xf32>
    %c0_24 = arith.constant 0 : index
    %c0_25 = arith.constant 0 : index
    %36 = vector.load %arg4[%c0_24, %c0_25] : memref<16x8xbf16, #tpu.memory_space<vmem>>, vector<16x8xbf16>
    %cst_26 = arith.constant dense<0.000000e+00> : vector<16x128xf32>
    %37 = tpu.matmul %36, %35, %cst_26 {dimension_numbers = #tpu.dot_dimension_numbers<[1], [0], [0], [1], [0, 0, 1, 1], [], []>} : vector<16x8xbf16>, vector<8x128xf32>, vector<16x128xf32> -> vector<16x128xf32>
    %38 = tpu.reciprocal %37 {approx = true} : vector<16x128xf32> -> vector<16x128xf32>
    %39 = arith.mulf %33, %38 : vector<16x128xf32>
    %c0_27 = arith.constant 0 : index
    %c0_28 = arith.constant 0 : index
    %40 = vector.load %arg10[%c0_27, %c0_28] : memref<128x128xf32, #tpu.memory_space<vmem>>, vector<128x128xf32>
    %cst_29 = arith.constant dense<0.000000e+00> : vector<16x128xf32>
    %41 = tpu.matmul %39, %40, %cst_29 {dimension_numbers = #tpu.dot_dimension_numbers<[1], [0], [0], [1], [0, 0, 1, 1], [], []>} : vector<16x128xf32>, vector<128x128xf32>, vector<16x128xf32> -> vector<16x128xf32>
    %42 = arith.addf %18, %20 : vector<16x128xf32>
    %43 = arith.mulf %41, %42 : vector<16x128xf32>
    %c0_30 = arith.constant 0 : index
    %c0_31 = arith.constant 0 : index
    %44 = vector.load %arg5[%c0_30, %c0_31] : memref<8x16xbf16, #tpu.memory_space<vmem>>, vector<8x16xbf16>
    %cst_32 = arith.constant dense<0.000000e+00> : vector<8x128xf32>
    %45 = tpu.matmul %44, %43, %cst_32 {dimension_numbers = #tpu.dot_dimension_numbers<[1], [0], [0], [1], [0, 0, 1, 1], [], []>} : vector<8x16xbf16>, vector<16x128xf32>, vector<8x128xf32> -> vector<8x128xf32>
    %c0_33 = arith.constant 0 : index
    %c0_34 = arith.constant 0 : index
    %46 = vector.load %arg11[%c0_33, %c0_34] : memref<8x128xf32, #tpu.memory_space<vmem>>, vector<8x128xf32>
    tpu.vector_store %arg11[%c0_33, %c0_34], %45 {strides = array<i32>} : memref<8x128xf32, #tpu.memory_space<vmem>>, vector<8x128xf32>,
    %c0_35 = arith.constant 0 : index
    %c0_36 = arith.constant 0 : index
    %47 = vector.load %arg12[%c0_35, %c0_36] : memref<16x128xf32, #tpu.memory_space<vmem>>, vector<16x128xf32>
    tpu.vector_store %arg12[%c0_35, %c0_36], %39 {strides = array<i32>} : memref<16x128xf32, #tpu.memory_space<vmem>>, vector<16x128xf32>,
    return
  }
  func.func @transform_0(%arg0: i32) -> (i32, i32) {
    %c0_i32 = arith.constant 0 : i32
    %c0_i32_0 = arith.constant 0 : i32
    %c0_i32_1 = arith.constant 0 : i32
    return %c0_i32, %c0_i32_0 : i32, i32
  }
  func.func @transform_1(%arg0: i32) -> (i32, i32) {
    %c0_i32 = arith.constant 0 : i32
    %c0_i32_0 = arith.constant 0 : i32
    %c0_i32_1 = arith.constant 0 : i32
    return %c0_i32, %c0_i32_0 : i32, i32
  }
  func.func @transform_2(%arg0: i32) -> (i32, i32) {
    %c0_i32 = arith.constant 0 : i32
    %c0_i32_0 = arith.constant 0 : i32
    %c0_i32_1 = arith.constant 0 : i32
    return %c0_i32, %c0_i32_0 : i32, i32
  }
  func.func @transform_3(%arg0: i32) -> (i32, i32) {
    %c0_i32 = arith.constant 0 : i32
    %c0_i32_0 = arith.constant 0 : i32
    %c0_i32_1 = arith.constant 0 : i32
    return %c0_i32, %c0_i32_0 : i32, i32
  }
  func.func @transform_4(%arg0: i32) -> (i32, i32) {
    %c0_i32 = arith.constant 0 : i32
    %c0_i32_0 = arith.constant 0 : i32
    %c0_i32_1 = arith.constant 0 : i32
    return %c0_i32, %c0_i32_0 : i32, i32
  }
  func.func @transform_5(%arg0: i32) -> (i32, i32) {
    %c0_i32 = arith.constant 0 : i32
    %c0_i32_0 = arith.constant 0 : i32
    %c0_i32_1 = arith.constant 0 : i32
    return %c0_i32, %c0_i32_0 : i32, i32
  }
  func.func @transform_6(%arg0: i32) -> (i32, i32) {
    %c0_i32 = arith.constant 0 : i32
    %c0_i32_0 = arith.constant 0 : i32
    %c0_i32_1 = arith.constant 0 : i32
    return %c0_i32, %c0_i32_0 : i32, i32
  }
  func.func @transform_7(%arg0: i32) -> (i32, i32) {
    %c0_i32 = arith.constant 0 : i32
    %c0_i32_0 = arith.constant 0 : i32
    %c0_i32_1 = arith.constant 0 : i32
    return %c0_i32, %c0_i32_0 : i32, i32
  }
  func.func @transform_8(%arg0: i32) -> (i32, i32) {
    %c0_i32 = arith.constant 0 : i32
    %c0_i32_0 = arith.constant 0 : i32
    %c0_i32_1 = arith.constant 0 : i32
    return %c0_i32, %c0_i32_0 : i32, i32
  }
  func.func @transform_9(%arg0: i32) -> (i32, i32) {
    %c0_i32 = arith.constant 0 : i32
    %c0_i32_0 = arith.constant 0 : i32
    %c0_i32_1 = arith.constant 0 : i32
    return %c0_i32, %c0_i32_0 : i32, i32
  }
  func.func @transform_10(%arg0: i32) -> (i32, i32) {
    %c0_i32 = arith.constant 0 : i32
    %c0_i32_0 = arith.constant 0 : i32
    %c0_i32_1 = arith.constant 0 : i32
    return %c0_i32, %c0_i32_0 : i32, i32
  }
  func.func @transform_11(%arg0: i32) -> (i32, i32) {
    %c0_i32 = arith.constant 0 : i32
    %c0_i32_0 = arith.constant 0 : i32
    %c0_i32_1 = arith.constant 0 : i32
    return %c0_i32, %c0_i32_0 : i32, i32
  }
}

</mosaic_0001>

<llo_original>
// kernel: tpu_custom_call.1
$region0: #{tpu_custom_call.1}
  #allocation0 [shape = 'u32[]', space=smem, size = 0x4, offset = 0x4, fixed_abs, tag = 'smem constant byte address 0x4 - core index']
  #allocation1 [shape = 'u32[144,128]{1,0:T(1,128)}', space=vmem, size = 0x12000, scoped, tag = 'internal scratch']
  %s0 = inlined_call_operand.hbm [shape: f32[8,32], index: 0, kind: input, shape index: {}]
  %s1 = inlined_call_operand.vmem [shape: f32[16,16], index: 1, kind: input, shape index: {}]
  %s2 = inlined_call_operand.vmem [shape: bf16[16,8], index: 2, kind: input, shape index: {}]
  %s3 = inlined_call_operand.vmem [shape: bf16[16,8], index: 3, kind: input, shape index: {}]
  %s4 = inlined_call_operand.hbm [shape: bf16[8,16], index: 4, kind: input, shape index: {}]
  %s5 = inlined_call_operand.hbm [shape: f32[32,384], index: 5, kind: input, shape index: {}]
  %s6 = inlined_call_operand.hbm [shape: f32[1,384], index: 6, kind: input, shape index: {}]
  %s7 = inlined_call_operand.vmem [shape: f32[16,256], index: 7, kind: input, shape index: {}]
  %s8 = inlined_call_operand.vmem [shape: f32[1,256], index: 8, kind: input, shape index: {}]
  %s9 = inlined_call_operand.hbm [shape: f32[128,128], index: 9, kind: input, shape index: {}]
  %s10 = inlined_call_operand.hbm [shape: f32[8,128], index: 10, kind: output, shape index: {0}]
  %s11 = inlined_call_operand.hbm [shape: f32[16,128], index: 11, kind: output, shape index: {1}]
  %12 = xla_tuple %s10, %s11
  %s13 = sld [smem:[#allocation0]]
  $region78: #{tpu_custom_call.1} parent=0
    _
  %s15 = ssub.s32 1, %s13
  %s16 = scalar_select 0, %s15, %s13
  $region1: #{tpu_custom_call.1} parent=0
    #allocation2 [shape = 'u8[4096]{0}', space=vmem, size = 0x1000, scoped, tag = 'input window, operand 0, single buffered']
    #allocation3 [shape = 's32[1]{0}', space=sflag, size = 0x4, scoped, tag = 'scoped memory for tpu_custom_call.1']
    #allocation4 [shape = 's32[1]{0}', space=sflag, size = 0x4, scoped, tag = 'scoped memory for tpu_custom_call.1']
    #allocation5 [shape = 'u8[2048]{0}', space=vmem, size = 0x800, scoped, tag = 'input window, operand 4, single buffered']
    #allocation6 [shape = 's32[1]{0}', space=sflag, size = 0x4, scoped, tag = 'scoped memory for tpu_custom_call.1']
    #allocation7 [shape = 'u8[49152]{0}', space=vmem, size = 0xc000, scoped, tag = 'input window, operand 5, single buffered']
    #allocation8 [shape = 'u8[1536]{0}', space=vmem, size = 0x800, scoped, tag = 'input window, operand 6, single buffered']
    #allocation9 [shape = 's32[1]{0}', space=sflag, size = 0x4, scoped, tag = 'scoped memory for tpu_custom_call.1']
    #allocation10 [shape = 'u8[65536]{0}', space=vmem, size = 0x10000, scoped, tag = 'input window, operand 9, single buffered']
    #allocation11 [shape = 'u8[4096]{0}', space=vmem, size = 0x1000, scoped, tag = 'output window, operand 0, single buffered']
    #allocation12 [shape = 'u8[8192]{0}', space=vmem, size = 0x2000, scoped, tag = 'output window, operand 1, single buffered']
    #allocation13 [shape = 's32[1]{0}', space=sflag, size = 0x4, scoped, tag = 'scoped memory for tpu_custom_call.1']
    %17 = vsyncpa [#allocation3], 0
    %18 = vsyncpa [#allocation6], 0
    %19 = vsyncpa [#allocation9], 0
    %20 = vsyncpa [#allocation4], 0
    %21 = vsyncpa [#allocation13], 0
    // Predicated region
    $region2: #{tpu_custom_call.1} parent=1 // pred_check
      _
    $region3: #{tpu_custom_call.1} parent=1 // pred_check_branch
      %23 = sbr.rel (0) target = $region5
    $region4: #{tpu_custom_call.1} parent=1 // pred_region
      %s25 = ssub.s32 128, 128
      %26 = vsyncadd [#allocation3], %s25
      %s28 = sshll.u32 [#allocation2], 4
      %s29 = int_to_ptr.vmem [resolvable:$true] %s28
      %31 = dma.hbm_to_vmem [thread:$0]  %s0, 128, %s29, [#allocation3]
    $region5: #{tpu_custom_call.1} parent=1 // pred_fallthru
      _
    // Predicated region
    $region6: #{tpu_custom_call.1} parent=1 // pred_check
      _
    $region7: #{tpu_custom_call.1} parent=1 // pred_check_branch
      %33 = sbr.rel (0) target = $region9
    $region8: #{tpu_custom_call.1} parent=1 // pred_region
      _
    $region9: #{tpu_custom_call.1} parent=1 // pred_fallthru
      _
    // Predicated region
    $region10: #{tpu_custom_call.1} parent=1 // pred_check
      _
    $region11: #{tpu_custom_call.1} parent=1 // pred_check_branch
      %35 = sbr.rel (0) target = $region13
    $region12: #{tpu_custom_call.1} parent=1 // pred_region
      _
    $region13: #{tpu_custom_call.1} parent=1 // pred_fallthru
      _
    // Predicated region
    $region14: #{tpu_custom_call.1} parent=1 // pred_check
      _
    $region15: #{tpu_custom_call.1} parent=1 // pred_check_branch
      %37 = sbr.rel (0) target = $region17
    $region16: #{tpu_custom_call.1} parent=1 // pred_region
      _
    $region17: #{tpu_custom_call.1} parent=1 // pred_fallthru
      _
    // Predicated region
    $region18: #{tpu_custom_call.1} parent=1 // pred_check
      _
    $region19: #{tpu_custom_call.1} parent=1 // pred_check_branch
      %39 = sbr.rel (0) target = $region21
    $region20: #{tpu_custom_call.1} parent=1 // pred_region
      %s41 = ssub.s32 64, 64
      %42 = vsyncadd [#allocation6], %s41
      %s44 = sshll.u32 [#allocation5], 4
      %s45 = int_to_ptr.vmem [resolvable:$true] %s44
      %47 = dma.hbm_to_vmem [thread:$0]  %s4, 64, %s45, [#allocation6]
    $region21: #{tpu_custom_call.1} parent=1 // pred_fallthru
      _
    // Predicated region
    $region22: #{tpu_custom_call.1} parent=1 // pred_check
      _
    $region23: #{tpu_custom_call.1} parent=1 // pred_check_branch
      %49 = sbr.rel (0) target = $region25
    $region24: #{tpu_custom_call.1} parent=1 // pred_region
      %s51 = ssub.s32 1536, 1536
      %52 = vsyncadd [#allocation6], %s51
      %s53 = sshll.u32 [#allocation7], 4
      %s54 = int_to_ptr.vmem [resolvable:$true] %s53
      %59 = dma.hbm_to_vmem [thread:$0]  %s5, 1536, %s54, [#allocation6], 384, 384, 24
    $region25: #{tpu_custom_call.1} parent=1 // pred_fallthru
      _
    // Predicated region
    $region26: #{tpu_custom_call.1} parent=1 // pred_check
      _
    $region27: #{tpu_custom_call.1} parent=1 // pred_check_branch
      %61 = sbr.rel (0) target = $region29
    $region28: #{tpu_custom_call.1} parent=1 // pred_region
      %s63 = ssub.s32 48, 48
      %64 = vsyncadd [#allocation9], %s63
      %s66 = sshll.u32 [#allocation8], 4
      %s67 = int_to_ptr.vmem [resolvable:$true] %s66
      %69 = dma.hbm_to_vmem [thread:$0]  %s6, 48, %s67, [#allocation9]
    $region29: #{tpu_custom_call.1} parent=1 // pred_fallthru
      _
    // Predicated region
    $region30: #{tpu_custom_call.1} parent=1 // pred_check
      _
    $region31: #{tpu_custom_call.1} parent=1 // pred_check_branch
      %71 = sbr.rel (0) target = $region33
    $region32: #{tpu_custom_call.1} parent=1 // pred_region
      _
    $region33: #{tpu_custom_call.1} parent=1 // pred_fallthru
      _
    // Predicated region
    $region34: #{tpu_custom_call.1} parent=1 // pred_check
      _
    $region35: #{tpu_custom_call.1} parent=1 // pred_check_branch
      %73 = sbr.rel (0) target = $region37
    $region36: #{tpu_custom_call.1} parent=1 // pred_region
      _
    $region37: #{tpu_custom_call.1} parent=1 // pred_fallthru
      _
    // Predicated region
    $region38: #{tpu_custom_call.1} parent=1 // pred_check
      _
    $region39: #{tpu_custom_call.1} parent=1 // pred_check_branch
      %75 = sbr.rel (0) target = $region41
    $region40: #{tpu_custom_call.1} parent=1 // pred_region
      %s77 = ssub.s32 2048, 2048
      %78 = vsyncadd [#allocation9], %s77
      %s79 = sshll.u32 [#allocation10], 4
      %s80 = int_to_ptr.vmem [resolvable:$true] %s79
      %85 = dma.hbm_to_vmem [thread:$0]  %s9, 2048, %s80, [#allocation9], 128, 128, 8
    $region41: #{tpu_custom_call.1} parent=1 // pred_fallthru
      _
    // Predicated region
    $region42: #{tpu_custom_call.1} parent=1 // pred_check
      _
    $region43: #{tpu_custom_call.1} parent=1 // pred_check_branch
      %87 = sbr.rel (0) target = $region45
    $region44: #{tpu_custom_call.1} parent=1 // pred_region
      %88 = dma.done [#allocation3], 128
    $region45: #{tpu_custom_call.1} parent=1 // pred_fallthru
      _
    // Predicated region
    $region46: #{tpu_custom_call.1} parent=1 // pred_check
      _
    $region47: #{tpu_custom_call.1} parent=1 // pred_check_branch
      %90 = sbr.rel (0) target = $region49
    $region48: #{tpu_custom_call.1} parent=1 // pred_region
      %91 = dma.done [#allocation6], 64
    $region49: #{tpu_custom_call.1} parent=1 // pred_fallthru
      _
    // Predicated region
    $region50: #{tpu_custom_call.1} parent=1 // pred_check
      _
    $region51: #{tpu_custom_call.1} parent=1 // pred_check_branch
      %93 = sbr.rel (0) target = $region53
    $region52: #{tpu_custom_call.1} parent=1 // pred_region
      %94 = dma.done [#allocation6], 1536
    $region53: #{tpu_custom_call.1} parent=1 // pred_fallthru
      _
    // Predicated region
    $region54: #{tpu_custom_call.1} parent=1 // pred_check
      _
    $region55: #{tpu_custom_call.1} parent=1 // pred_check_branch
      %96 = sbr.rel (0) target = $region57
    $region56: #{tpu_custom_call.1} parent=1 // pred_region
      %97 = dma.done [#allocation9], 48
    $region57: #{tpu_custom_call.1} parent=1 // pred_fallthru
      _
    // Predicated region
    $region58: #{tpu_custom_call.1} parent=1 // pred_check
      _
    $region59: #{tpu_custom_call.1} parent=1 // pred_check_branch
      %99 = sbr.rel (0) target = $region61
    $region60: #{tpu_custom_call.1} parent=1 // pred_region
      %100 = dma.done [#allocation9], 2048
    $region61: #{tpu_custom_call.1} parent=1 // pred_fallthru
      _
    %v102 = vld [vmem:[#allocation2] sm:$0xff]
    %v103 = vld [vmem:[#allocation7] sm:$0xff]
    %v104 = vld [vmem:[#allocation7 + $0x8] sm:$0xff]
    %v105 = vld [vmem:[#allocation7 + $0x10] sm:$0xff]
    %v106 = vld [vmem:[#allocation7 + $0x18] sm:$0xff]
    %v107 = vld [vmem:[#allocation7 + $0x20] sm:$0xff]
    %v108 = vld [vmem:[#allocation7 + $0x28] sm:$0xff]
    %v109 = vld [vmem:[#allocation7 + $0x30] sm:$0xff]
    %v110 = vld [vmem:[#allocation7 + $0x38] sm:$0xff]
    %v111 = vld [vmem:[#allocation7 + $0x40] sm:$0xff]
    %v112 = vld [vmem:[#allocation7 + $0x48] sm:$0xff]
    %v113 = vld [vmem:[#allocation7 + $0x50] sm:$0xff]
    %v114 = vld [vmem:[#allocation7 + $0x58] sm:$0xff]
    %v115 = vld [vmem:[#allocation8] sm:$0x7]
    %v117 = vlaneseq
    %v118 = vshrl.u32 %v117, 7
    %v119 = vsub.s32 0, %v118
    %v120 = vrot.slane %v115, %v119
    %v121 = vlaneseq
    %v122 = vshrl.u32 %v121, 7
    %v123 = vsub.s32 1, %v122
    %v124 = vrot.slane %v115, %v123
    %v125 = vlaneseq
    %v126 = vshrl.u32 %v125, 7
    %v127 = vsub.s32 2, %v126
    %v128 = vrot.slane %v115, %v127
    %vm132 = vcmask 261120
    %v134 = vsel %vm132, %v102, 0
    %136 = vmatprep.subr.mxu0 %v104
    %137 = vmatpush1.msra.mxu0 %v103
    %138 = vmatprep.subr.mxu0 %v107
    %139 = vmatpush1.msra.mxu0 %v106
    %140 = vmatprep.subr.mxu0 %v110
    %141 = vmatpush1.msra.mxu0 %v109
    %142 = vmatprep.subr.mxu0 %v113
    %143 = vmatpush1.msra.mxu0 %v112
    %144 = vmatprep.subr.mxu0 0.0
    %145 = vmatpush1.msra.mxu0 0.0
    %146 = vmatprep.subr.mxu0 0.0
    %147 = vmatpush1.msra.mxu0 0.0
    %148 = vmatprep.subr.mxu0 0.0
    %149 = vmatpush1.msra.mxu0 0.0
    %150 = vmatprep.subr.mxu0 0.0
    %151 = vmatpush1.msra.mxu0 0.0
    %152 = vmatprep.subr.mxu0 0.0
    %153 = vmatpush1.msra.mxu0 0.0
    %154 = vmatprep.subr.mxu0 0.0
    %155 = vmatpush1.msra.mxu0 0.0
    %156 = vmatprep.subr.mxu0 0.0
    %157 = vmatpush1.msra.mxu0 0.0
    %158 = vmatprep.subr.mxu0 0.0
    %159 = vmatpush1.msra.mxu0 0.0
    %160 = vmatprep.subr.mxu0 0.0
    %161 = vmatpush1.msra.mxu0 0.0
    %162 = vmatprep.subr.mxu0 0.0
    %163 = vmatpush1.msra.mxu0 0.0
    %164 = vmatprep.subr.mxu0 0.0
    %165 = vmatpush1.msra.mxu0 0.0
    %166 = vmatprep.subr.mxu0 0.0
    %167 = vmatpush1.msra.mxu0 0.0
    %168 = vmatprep.subr.mxu0 0.0
    %169 = vmatpush1.msra.mxu0 0.0
    %170 = vmatprep.subr.mxu0 0.0
    %171 = vmatpush1.msra.mxu0 0.0
    %172 = vmatprep.subr.mxu0 0.0
    %173 = vmatpush1.msra.mxu0 0.0
    %174 = vmatprep.subr.mxu0 0.0
    %175 = vmatpush1.msra.mxu0 0.0
    %176 = vmatprep.subr.mxu0 0.0
    %177 = vmatpush1.msra.mxu0 0.0
    %178 = vmatprep.subr.mxu0 0.0
    %179 = vmatpush1.msra.mxu0 0.0
    %180 = vmatprep.subr.mxu0 0.0
    %181 = vmatpush1.msra.mxu0 0.0
    %182 = vmatprep.subr.mxu0 0.0
    %183 = vmatpush1.msra.mxu0 0.0
    %184 = vmatprep.subr.mxu0 0.0
    %185 = vmatpush1.msra.mxu0 0.0
    %186 = vmatprep.subr.mxu0 0.0
    %187 = vmatpush1.msra.mxu0 0.0
    %188 = vmatprep.subr.mxu0 0.0
    %189 = vmatpush1.msra.mxu0 0.0
    %190 = vmatprep.subr.mxu0 0.0
    %191 = vmatpush1.msra.mxu0 0.0
    %192 = vmatprep.subr.mxu0 0.0
    %193 = vmatpush1.msra.mxu0 0.0
    %194 = vmatprep.subr.mxu0 0.0
    %195 = vmatpush1.msra.mxu0 0.0
    %196 = vmatprep.subr.mxu0 0.0
    %197 = vmatpush1.msra.mxu0 0.0
    %198 = vmatprep.subr.mxu0 0.0
    %199 = vmatpush1.msra.mxu0 0.0
    %200 = vmatprep.mubr.f32.mxu0 0.0
    %201 = vmatmul.mubr.f32.gmra.mrb[0].mxu0 %v134
    %v202 = vpop.f32.mrb[0].mxu0
    %v203 = vadd.f32 %v120, %v202
    %v204 = vpop.f32.mrb[0].mxu0
    %v205 = vadd.f32 %v124, %v204
    %206 = vdwg.mxu0
    %207 = vmatprep.subr.mxu0 0.0
    %208 = vmatpush1.msra.mxu0 %v105
    %209 = vmatprep.subr.mxu0 0.0
    %210 = vmatpush1.msra.mxu0 %v108
    %211 = vmatprep.subr.mxu0 0.0
    %212 = vmatpush1.msra.mxu0 %v111
    %213 = vmatprep.subr.mxu0 0.0
    %214 = vmatpush1.msra.mxu0 %v114
    %215 = vmatprep.subr.mxu0 0.0
    %216 = vmatpush1.msra.mxu0 0.0
    %217 = vmatprep.subr.mxu0 0.0
    %218 = vmatpush1.msra.mxu0 0.0
    %219 = vmatprep.subr.mxu0 0.0
    %220 = vmatpush1.msra.mxu0 0.0
    %221 = vmatprep.subr.mxu0 0.0
    %222 = vmatpush1.msra.mxu0 0.0
    %223 = vmatprep.subr.mxu0 0.0
    %224 = vmatpush1.msra.mxu0 0.0
    %225 = vmatprep.subr.mxu0 0.0
    %226 = vmatpush1.msra.mxu0 0.0
    %227 = vmatprep.subr.mxu0 0.0
    %228 = vmatpush1.msra.mxu0 0.0
    %229 = vmatprep.subr.mxu0 0.0
    %230 = vmatpush1.msra.mxu0 0.0
    %231 = vmatprep.subr.mxu0 0.0
    %232 = vmatpush1.msra.mxu0 0.0
    %233 = vmatprep.subr.mxu0 0.0
    %234 = vmatpush1.msra.mxu0 0.0
    %235 = vmatprep.subr.mxu0 0.0
    %236 = vmatpush1.msra.mxu0 0.0
    %237 = vmatprep.subr.mxu0 0.0
    %238 = vmatpush1.msra.mxu0 0.0
    %239 = vmatprep.subr.mxu0 0.0
    %240 = vmatpush1.msra.mxu0 0.0
    %241 = vmatprep.subr.mxu0 0.0
    %242 = vmatpush1.msra.mxu0 0.0
    %243 = vmatprep.subr.mxu0 0.0
    %244 = vmatpush1.msra.mxu0 0.0
    %245 = vmatprep.subr.mxu0 0.0
    %246 = vmatpush1.msra.mxu0 0.0
    %247 = vmatprep.subr.mxu0 0.0
    %248 = vmatpush1.msra.mxu0 0.0
    %249 = vmatprep.subr.mxu0 0.0
    %250 = vmatpush1.msra.mxu0 0.0
    %251 = vmatprep.subr.mxu0 0.0
    %252 = vmatpush1.msra.mxu0 0.0
    %253 = vmatprep.subr.mxu0 0.0
    %254 = vmatpush1.msra.mxu0 0.0
    %255 = vmatprep.subr.mxu0 0.0
    %256 = vmatpush1.msra.mxu0 0.0
    %257 = vmatprep.subr.mxu0 0.0
    %258 = vmatpush1.msra.mxu0 0.0
    %259 = vmatprep.subr.mxu0 0.0
    %260 = vmatpush1.msra.mxu0 0.0
    %261 = vmatprep.subr.mxu0 0.0
    %262 = vmatpush1.msra.mxu0 0.0
    %263 = vmatprep.subr.mxu0 0.0
    %264 = vmatpush1.msra.mxu0 0.0
    %265 = vmatprep.subr.mxu0 0.0
    %266 = vmatpush1.msra.mxu0 0.0
    %267 = vmatprep.subr.mxu0 0.0
    %268 = vmatpush1.msra.mxu0 0.0
    %269 = vmatprep.subr.mxu0 0.0
    %270 = vmatpush1.msra.mxu0 0.0
    %271 = vmatprep.mubr.f32.mxu0 0.0
    %272 = vmatmul.mubr.f32.gmra.mrb[0].mxu0 %v134
    %v273 = vpop.f32.mrb[0].mxu0
    %v274 = vadd.f32 %v128, %v273
    %v275 = vpop.f32.mrb[0].mxu0
    %276 = vdwg.mxu0
    %v277 = vld [vmem:[%s1] sm:$0xff]
    %v278 = vld [vmem:[%s1 + $0x8] sm:$0xff]
    %v279 = vld [vmem:[%s7] sm:$0xff]
    %v280 = vld [vmem:[%s7 + $0x8] sm:$0xff]
    %v281 = vld [vmem:[%s7 + $0x10] sm:$0xff]
    %v282 = vld [vmem:[%s7 + $0x18] sm:$0xff]
    %v283 = vld [vmem:[%s8] sm:$0x3]
    %v285 = vlaneseq
    %v286 = vshrl.u32 %v285, 7
    %v287 = vsub.s32 0, %v286
    %v288 = vrot.slane %v283, %v287
    %v289 = vlaneseq
    %v290 = vshrl.u32 %v289, 7
    %v291 = vsub.s32 1, %v290
    %v292 = vrot.slane %v283, %v291
    %vm295 = vcmask 130048
    %v297 = vsel %vm295, %v277, 0
    %v300 = vsel %vm295, %v278, 0
    %302 = vmatprep.subr.mxu0 %v280
    %303 = vmatpush1.msra.mxu0 %v279
    %304 = vmatprep.subr.mxu0 %v282
    %305 = vmatpush1.msra.mxu0 %v281
    %306 = vmatprep.subr.mxu0 0.0
    %307 = vmatpush1.msra.mxu0 0.0
    %308 = vmatprep.subr.mxu0 0.0
    %309 = vmatpush1.msra.mxu0 0.0
    %310 = vmatprep.subr.mxu0 0.0
    %311 = vmatpush1.msra.mxu0 0.0
    %312 = vmatprep.subr.mxu0 0.0
    %313 = vmatpush1.msra.mxu0 0.0
    %314 = vmatprep.subr.mxu0 0.0
    %315 = vmatpush1.msra.mxu0 0.0
    %316 = vmatprep.subr.mxu0 0.0
    %317 = vmatpush1.msra.mxu0 0.0
    %318 = vmatprep.subr.mxu0 0.0
    %319 = vmatpush1.msra.mxu0 0.0
    %320 = vmatprep.subr.mxu0 0.0
    %321 = vmatpush1.msra.mxu0 0.0
    %322 = vmatprep.subr.mxu0 0.0
    %323 = vmatpush1.msra.mxu0 0.0
    %324 = vmatprep.subr.mxu0 0.0
    %325 = vmatpush1.msra.mxu0 0.0
    %326 = vmatprep.subr.mxu0 0.0
    %327 = vmatpush1.msra.mxu0 0.0
    %328 = vmatprep.subr.mxu0 0.0
    %329 = vmatpush1.msra.mxu0 0.0
    %330 = vmatprep.subr.mxu0 0.0
    %331 = vmatpush1.msra.mxu0 0.0
    %332 = vmatprep.subr.mxu0 0.0
    %333 = vmatpush1.msra.mxu0 0.0
    %334 = vmatprep.subr.mxu0 0.0
    %335 = vmatpush1.msra.mxu0 0.0
    %336 = vmatprep.subr.mxu0 0.0
    %337 = vmatpush1.msra.mxu0 0.0
    %338 = vmatprep.subr.mxu0 0.0
    %339 = vmatpush1.msra.mxu0 0.0
    %340 = vmatprep.subr.mxu0 0.0
    %341 = vmatpush1.msra.mxu0 0.0
    %342 = vmatprep.subr.mxu0 0.0
    %343 = vmatpush1.msra.mxu0 0.0
    %344 = vmatprep.subr.mxu0 0.0
    %345 = vmatpush1.msra.mxu0 0.0
    %346 = vmatprep.subr.mxu0 0.0
    %347 = vmatpush1.msra.mxu0 0.0
    %348 = vmatprep.subr.mxu0 0.0
    %349 = vmatpush1.msra.mxu0 0.0
    %350 = vmatprep.subr.mxu0 0.0
    %351 = vmatpush1.msra.mxu0 0.0
    %352 = vmatprep.subr.mxu0 0.0
    %353 = vmatpush1.msra.mxu0 0.0
    %354 = vmatprep.subr.mxu0 0.0
    %355 = vmatpush1.msra.mxu0 0.0
    %356 = vmatprep.subr.mxu0 0.0
    %357 = vmatpush1.msra.mxu0 0.0
    %358 = vmatprep.subr.mxu0 0.0
    %359 = vmatpush1.msra.mxu0 0.0
    %360 = vmatprep.subr.mxu0 0.0
    %361 = vmatpush1.msra.mxu0 0.0
    %362 = vmatprep.subr.mxu0 0.0
    %363 = vmatpush1.msra.mxu0 0.0
    %364 = vmatprep.subr.mxu0 0.0
    %365 = vmatpush1.msra.mxu0 0.0
    %366 = vmatprep.mubr.f32.mxu0 0.0
    %367 = vmatmul.mubr.f32.gmra.mrb[0].mxu0 %v297
    %v368 = vpop.f32.mrb[0].mxu0
    %v369 = vadd.f32 %v288, %v368
    %v370 = vpop.f32.mrb[0].mxu0
    %v371 = vadd.f32 %v292, %v370
    %372 = vmatprep.mubr.f32.mxu0 0.0
    %373 = vmatmul.mubr.f32.gmra.mrb[0].mxu0 %v300
    %v374 = vpop.f32.mrb[0].mxu0
    %v375 = vadd.f32 %v288, %v374
    %v376 = vpop.f32.mrb[0].mxu0
    %v377 = vadd.f32 %v292, %v376
    %378 = vdwg.mxu0
    %v379 = vld [vmem:[%s2] sm:$0xf]
    %v380 = vld [vmem:[%s2 + $0x4] sm:$0xf]
    %v383 = vunpack.c.l.b16 %v379
    %v384 = vunpack.c.l.b16 %v380
    %v385 = vpack.c.b16 %v384, %v383
    %vm386 = vcmask 64512
    %v388 = vsel %vm386, %v385, 0
    %390 = vmatprep.subr.mxu0 %v205
    %391 = vmatpush1.msra.mxu0 %v203
    %392 = vmatprep.subr.mxu0 0.0
    %393 = vmatpush1.msra.mxu0 0.0
    %394 = vmatprep.subr.mxu0 0.0
    %395 = vmatpush1.msra.mxu0 0.0
    %396 = vmatprep.subr.mxu0 0.0
    %397 = vmatpush1.msra.mxu0 0.0
    %398 = vmatprep.subr.mxu0 0.0
    %399 = vmatpush1.msra.mxu0 0.0
    %400 = vmatprep.subr.mxu0 0.0
    %401 = vmatpush1.msra.mxu0 0.0
    %402 = vmatprep.subr.mxu0 0.0
    %403 = vmatpush1.msra.mxu0 0.0
    %404 = vmatprep.subr.mxu0 0.0
    %405 = vmatpush1.msra.mxu0 0.0
    %406 = vmatprep.subr.mxu0 0.0
    %407 = vmatpush1.msra.mxu0 0.0
    %408 = vmatprep.subr.mxu0 0.0
    %409 = vmatpush1.msra.mxu0 0.0
    %410 = vmatprep.subr.mxu0 0.0
    %411 = vmatpush1.msra.mxu0 0.0
    %412 = vmatprep.subr.mxu0 0.0
    %413 = vmatpush1.msra.mxu0 0.0
    %414 = vmatprep.subr.mxu0 0.0
    %415 = vmatpush1.msra.mxu0 0.0
    %416 = vmatprep.subr.mxu0 0.0
    %417 = vmatpush1.msra.mxu0 0.0
    %418 = vmatprep.subr.mxu0 0.0
    %419 = vmatpush1.msra.mxu0 0.0
    %420 = vmatprep.subr.mxu0 0.0
    %421 = vmatpush1.msra.mxu0 0.0
    %422 = vmatprep.subr.mxu0 0.0
    %423 = vmatpush1.msra.mxu0 0.0
    %424 = vmatprep.subr.mxu0 0.0
    %425 = vmatpush1.msra.mxu0 0.0
    %426 = vmatprep.subr.mxu0 0.0
    %427 = vmatpush1.msra.mxu0 0.0
    %428 = vmatprep.subr.mxu0 0.0
    %429 = vmatpush1.msra.mxu0 0.0
    %430 = vmatprep.subr.mxu0 0.0
    %431 = vmatpush1.msra.mxu0 0.0
    %432 = vmatprep.subr.mxu0 0.0
    %433 = vmatpush1.msra.mxu0 0.0
    %434 = vmatprep.subr.mxu0 0.0
    %435 = vmatpush1.msra.mxu0 0.0
    %436 = vmatprep.subr.mxu0 0.0
    %437 = vmatpush1.msra.mxu0 0.0
    %438 = vmatprep.subr.mxu0 0.0
    %439 = vmatpush1.msra.mxu0 0.0
    %440 = vmatprep.subr.mxu0 0.0
    %441 = vmatpush1.msra.mxu0 0.0
    %442 = vmatprep.subr.mxu0 0.0
    %443 = vmatpush1.msra.mxu0 0.0
    %444 = vmatprep.subr.mxu0 0.0
    %445 = vmatpush1.msra.mxu0 0.0
    %446 = vmatprep.subr.mxu0 0.0
    %447 = vmatpush1.msra.mxu0 0.0
    %448 = vmatprep.subr.mxu0 0.0
    %449 = vmatpush1.msra.mxu0 0.0
    %450 = vmatprep.subr.mxu0 0.0
    %451 = vmatpush1.msra.mxu0 0.0
    %452 = vmatprep.subr.mxu0 0.0
    %453 = vmatpush1.msra.mxu0 0.0
    %454 = vmatprep.mubr.bf16.mxu0 0
    %455 = vmatmul.mubr.bf16.gmra.mrb[0].mxu0 %v388
    %v456 = vpop.f32.mrb[0].mxu0
    %v457 = vadd.f32 0.0, %v456
    %v458 = vpop.f32.mrb[0].mxu0
    %v459 = vadd.f32 0.0, %v458
    %v460 = vpop.f32.mrb[0].mxu0
    %v461 = vadd.f32 0.0, %v460
    %v462 = vpop.f32.mrb[0].mxu0
    %v463 = vadd.f32 0.0, %v462
    %464 = vdwg.mxu0
    %v465 = vld [vmem:[%s3] sm:$0xf]
    %v466 = vld [vmem:[%s3 + $0x4] sm:$0xf]
    %v469 = vunpack.c.l.b16 %v465
    %v470 = vunpack.c.l.b16 %v466
    %v471 = vpack.c.b16 %v470, %v469
    %v473 = vsel %vm386, %v471, 0
    %475 = vmatprep.subr.mxu0 0.0
    %476 = vmatpush1.msra.mxu0 %v274
    %477 = vmatprep.subr.mxu0 0.0
    %478 = vmatpush1.msra.mxu0 0.0
    %479 = vmatprep.subr.mxu0 0.0
    %480 = vmatpush1.msra.mxu0 0.0
    %481 = vmatprep.subr.mxu0 0.0
    %482 = vmatpush1.msra.mxu0 0.0
    %483 = vmatprep.subr.mxu0 0.0
    %484 = vmatpush1.msra.mxu0 0.0
    %485 = vmatprep.subr.mxu0 0.0
    %486 = vmatpush1.msra.mxu0 0.0
    %487 = vmatprep.subr.mxu0 0.0
    %488 = vmatpush1.msra.mxu0 0.0
    %489 = vmatprep.subr.mxu0 0.0
    %490 = vmatpush1.msra.mxu0 0.0
    %491 = vmatprep.subr.mxu0 0.0
    %492 = vmatpush1.msra.mxu0 0.0
    %493 = vmatprep.subr.mxu0 0.0
    %494 = vmatpush1.msra.mxu0 0.0
    %495 = vmatprep.subr.mxu0 0.0
    %496 = vmatpush1.msra.mxu0 0.0
    %497 = vmatprep.subr.mxu0 0.0
    %498 = vmatpush1.msra.mxu0 0.0
    %499 = vmatprep.subr.mxu0 0.0
    %500 = vmatpush1.msra.mxu0 0.0
    %501 = vmatprep.subr.mxu0 0.0
    %502 = vmatpush1.msra.mxu0 0.0
    %503 = vmatprep.subr.mxu0 0.0
    %504 = vmatpush1.msra.mxu0 0.0
    %505 = vmatprep.subr.mxu0 0.0
    %506 = vmatpush1.msra.mxu0 0.0
    %507 = vmatprep.subr.mxu0 0.0
    %508 = vmatpush1.msra.mxu0 0.0
    %509 = vmatprep.subr.mxu0 0.0
    %510 = vmatpush1.msra.mxu0 0.0
    %511 = vmatprep.subr.mxu0 0.0
    %512 = vmatpush1.msra.mxu0 0.0
    %513 = vmatprep.subr.mxu0 0.0
    %514 = vmatpush1.msra.mxu0 0.0
    %515 = vmatprep.subr.mxu0 0.0
    %516 = vmatpush1.msra.mxu0 0.0
    %517 = vmatprep.subr.mxu0 0.0
    %518 = vmatpush1.msra.mxu0 0.0
    %519 = vmatprep.subr.mxu0 0.0
    %520 = vmatpush1.msra.mxu0 0.0
    %521 = vmatprep.subr.mxu0 0.0
    %522 = vmatpush1.msra.mxu0 0.0
    %523 = vmatprep.subr.mxu0 0.0
    %524 = vmatpush1.msra.mxu0 0.0
    %525 = vmatprep.subr.mxu0 0.0
    %526 = vmatpush1.msra.mxu0 0.0
    %527 = vmatprep.subr.mxu0 0.0
    %528 = vmatpush1.msra.mxu0 0.0
    %529 = vmatprep.subr.mxu0 0.0
    %530 = vmatpush1.msra.mxu0 0.0
    %531 = vmatprep.subr.mxu0 0.0
    %532 = vmatpush1.msra.mxu0 0.0
    %533 = vmatprep.subr.mxu0 0.0
    %534 = vmatpush1.msra.mxu0 0.0
    %535 = vmatprep.subr.mxu0 0.0
    %536 = vmatpush1.msra.mxu0 0.0
    %537 = vmatprep.subr.mxu0 0.0
    %538 = vmatpush1.msra.mxu0 0.0
    %539 = vmatprep.mubr.bf16.mxu0 0
    %540 = vmatmul.mubr.bf16.gmra.mrb[0].mxu0 %v473
    %v541 = vpop.f32.mrb[0].mxu0
    %v542 = vadd.f32 %v459, %v541
    %v543 = vpop.f32.mrb[0].mxu0
    %v544 = vpop.f32.mrb[0].mxu0
    %v545 = vadd.f32 %v463, %v544
    %v546 = vpop.f32.mrb[0].mxu0
    %547 = vdwg.mxu0
    %v548 = vadd.f32 %v542, %v371
    %v549 = vadd.f32 %v545, %v377
    %vm550 = vcmp.gt.f32.partialorder %v548, 0.0
    %vm551 = vcmp.gt.f32.partialorder %v549, 0.0
    %v552 = vmul.f32 %v548, 0.2
    %v553 = vmul.f32 %v549, 0.2
    %v554 = vsel %vm550, %v548, %v552
    %v555 = vsel %vm551, %v549, %v553
    %v556 = vmax.f32 %v554, %v555
    %v557 = vrot.slane %v556, 4
    %v558 = vmax.f32 %v556, %v557
    %v559 = vrot.slane %v558, 2
    %v560 = vmax.f32 %v558, %v559
    %v561 = vrot.slane %v560, 1
    %v562 = vmax.f32 %v560, %v561
    %v563 = vsub.f32 %v554, %v562
    %v564 = vsub.f32 %v555, %v562
    %v565 = vmul.f32 %v563, 1.442695
    %v566 = vpow.pop %v565
    %v567 = vmul.f32 %v564, 1.442695
    %v568 = vpow.pop %v567
    %v569 = vld [vmem:[#allocation5] sm:$0xf]
    %v571 = vsel %vm295, %v569, 0
    %573 = vmatprep.subr.mxu0 0.0
    %574 = vmatpush1.msra.mxu0 %v566
    %575 = vmatprep.subr.mxu0 0.0
    %576 = vmatpush1.msra.mxu0 %v568
    %577 = vmatprep.subr.mxu0 0.0
    %578 = vmatpush1.msra.mxu0 0.0
    %579 = vmatprep.subr.mxu0 0.0
    %580 = vmatpush1.msra.mxu0 0.0
    %581 = vmatprep.subr.mxu0 0.0
    %582 = vmatpush1.msra.mxu0 0.0
    %583 = vmatprep.subr.mxu0 0.0
    %584 = vmatpush1.msra.mxu0 0.0
    %585 = vmatprep.subr.mxu0 0.0
    %586 = vmatpush1.msra.mxu0 0.0
    %587 = vmatprep.subr.mxu0 0.0
    %588 = vmatpush1.msra.mxu0 0.0
    %589 = vmatprep.subr.mxu0 0.0
    %590 = vmatpush1.msra.mxu0 0.0
    %591 = vmatprep.subr.mxu0 0.0
    %592 = vmatpush1.msra.mxu0 0.0
    %593 = vmatprep.subr.mxu0 0.0
    %594 = vmatpush1.msra.mxu0 0.0
    %595 = vmatprep.subr.mxu0 0.0
    %596 = vmatpush1.msra.mxu0 0.0
    %597 = vmatprep.subr.mxu0 0.0
    %598 = vmatpush1.msra.mxu0 0.0
    %599 = vmatprep.subr.mxu0 0.0
    %600 = vmatpush1.msra.mxu0 0.0
    %601 = vmatprep.subr.mxu0 0.0
    %602 = vmatpush1.msra.mxu0 0.0
    %603 = vmatprep.subr.mxu0 0.0
    %604 = vmatpush1.msra.mxu0 0.0
    %605 = vmatprep.subr.mxu0 0.0
    %606 = vmatpush1.msra.mxu0 0.0
    %607 = vmatprep.subr.mxu0 0.0
    %608 = vmatpush1.msra.mxu0 0.0
    %609 = vmatprep.subr.mxu0 0.0
    %610 = vmatpush1.msra.mxu0 0.0
    %611 = vmatprep.subr.mxu0 0.0
    %612 = vmatpush1.msra.mxu0 0.0
    %613 = vmatprep.subr.mxu0 0.0
    %614 = vmatpush1.msra.mxu0 0.0
    %615 = vmatprep.subr.mxu0 0.0
    %616 = vmatpush1.msra.mxu0 0.0
    %617 = vmatprep.subr.mxu0 0.0
    %618 = vmatpush1.msra.mxu0 0.0
    %619 = vmatprep.subr.mxu0 0.0
    %620 = vmatpush1.msra.mxu0 0.0
    %621 = vmatprep.subr.mxu0 0.0
    %622 = vmatpush1.msra.mxu0 0.0
    %623 = vmatprep.subr.mxu0 0.0
    %624 = vmatpush1.msra.mxu0 0.0
    %625 = vmatprep.subr.mxu0 0.0
    %626 = vmatpush1.msra.mxu0 0.0
    %627 = vmatprep.subr.mxu0 0.0
    %628 = vmatpush1.msra.mxu0 0.0
    %629 = vmatprep.subr.mxu0 0.0
    %630 = vmatpush1.msra.mxu0 0.0
    %631 = vmatprep.subr.mxu0 0.0
    %632 = vmatpush1.msra.mxu0 0.0
    %633 = vmatprep.subr.mxu0 0.0
    %634 = vmatpush1.msra.mxu0 0.0
    %635 = vmatprep.subr.mxu0 0.0
    %636 = vmatpush1.msra.mxu0 0.0
    %637 = vmatprep.mubr.bf16.mxu0 0
    %638 = vmatmul.mubr.bf16.gmra.mrb[0].mxu0 %v571
    %v639 = vpop.f32.mrb[0].mxu0
    %v640 = vadd.f32 0.0, %v639
    %v641 = vpop.f32.mrb[0].mxu0
    %v642 = vpop.f32.mrb[0].mxu0
    %v643 = vpop.f32.mrb[0].mxu0
    %644 = vdwg.mxu0
    %645 = vmatprep.subr.mxu0 0.0
    %646 = vmatpush1.msra.mxu0 %v640
    %647 = vmatprep.subr.mxu0 0.0
    %648 = vmatpush1.msra.mxu0 0.0
    %649 = vmatprep.subr.mxu0 0.0
    %650 = vmatpush1.msra.mxu0 0.0
    %651 = vmatprep.subr.mxu0 0.0
    %652 = vmatpush1.msra.mxu0 0.0
    %653 = vmatprep.subr.mxu0 0.0
    %654 = vmatpush1.msra.mxu0 0.0
    %655 = vmatprep.subr.mxu0 0.0
    %656 = vmatpush1.msra.mxu0 0.0
    %657 = vmatprep.subr.mxu0 0.0
    %658 = vmatpush1.msra.mxu0 0.0
    %659 = vmatprep.subr.mxu0 0.0
    %660 = vmatpush1.msra.mxu0 0.0
    %661 = vmatprep.subr.mxu0 0.0
    %662 = vmatpush1.msra.mxu0 0.0
    %663 = vmatprep.subr.mxu0 0.0
    %664 = vmatpush1.msra.mxu0 0.0
    %665 = vmatprep.subr.mxu0 0.0
    %666 = vmatpush1.msra.mxu0 0.0
    %667 = vmatprep.subr.mxu0 0.0
    %668 = vmatpush1.msra.mxu0 0.0
    %669 = vmatprep.subr.mxu0 0.0
    %670 = vmatpush1.msra.mxu0 0.0
    %671 = vmatprep.subr.mxu0 0.0
    %672 = vmatpush1.msra.mxu0 0.0
    %673 = vmatprep.subr.mxu0 0.0
    %674 = vmatpush1.msra.mxu0 0.0
    %675 = vmatprep.subr.mxu0 0.0
    %676 = vmatpush1.msra.mxu0 0.0
    %677 = vmatprep.subr.mxu0 0.0
    %678 = vmatpush1.msra.mxu0 0.0
    %679 = vmatprep.subr.mxu0 0.0
    %680 = vmatpush1.msra.mxu0 0.0
    %681 = vmatprep.subr.mxu0 0.0
    %682 = vmatpush1.msra.mxu0 0.0
    %683 = vmatprep.subr.mxu0 0.0
    %684 = vmatpush1.msra.mxu0 0.0
    %685 = vmatprep.subr.mxu0 0.0
    %686 = vmatpush1.msra.mxu0 0.0
    %687 = vmatprep.subr.mxu0 0.0
    %688 = vmatpush1.msra.mxu0 0.0
    %689 = vmatprep.subr.mxu0 0.0
    %690 = vmatpush1.msra.mxu0 0.0
    %691 = vmatprep.subr.mxu0 0.0
    %692 = vmatpush1.msra.mxu0 0.0
    %693 = vmatprep.subr.mxu0 0.0
    %694 = vmatpush1.msra.mxu0 0.0
    %695 = vmatprep.subr.mxu0 0.0
    %696 = vmatpush1.msra.mxu0 0.0
    %697 = vmatprep.subr.mxu0 0.0
    %698 = vmatpush1.msra.mxu0 0.0
    %699 = vmatprep.subr.mxu0 0.0
    %700 = vmatpush1.msra.mxu0 0.0
    %701 = vmatprep.subr.mxu0 0.0
    %702 = vmatpush1.msra.mxu0 0.0
    %703 = vmatprep.subr.mxu0 0.0
    %704 = vmatpush1.msra.mxu0 0.0
    %705 = vmatprep.subr.mxu0 0.0
    %706 = vmatpush1.msra.mxu0 0.0
    %707 = vmatprep.subr.mxu0 0.0
    %708 = vmatpush1.msra.mxu0 0.0
    %709 = vmatprep.mubr.bf16.mxu0 0
    %710 = vmatmul.mubr.bf16.gmra.mrb[0].mxu0 %v473
    %v711 = vpop.f32.mrb[0].mxu0
    %v712 = vadd.f32 0.0, %v711
    %v713 = vpop.f32.mrb[0].mxu0
    %v714 = vpop.f32.mrb[0].mxu0
    %v715 = vadd.f32 0.0, %v714
    %v716 = vpop.f32.mrb[0].mxu0
    %717 = vdwg.mxu0
    %v718 = vrcp.pop %v712
    %v719 = vrcp.pop %v715
    %v720 = vmul.f32 %v566, %v718
    %v721 = vmul.f32 %v568, %v719
    %v722 = vld [vmem:[#allocation10] sm:$0xff]
    %v723 = vld [vmem:[#allocation10 + $0x8] sm:$0xff]
    %v724 = vld [vmem:[#allocation10 + $0x10] sm:$0xff]
    %v725 = vld [vmem:[#allocation10 + $0x18] sm:$0xff]
    %v726 = vld [vmem:[#allocation10 + $0x20] sm:$0xff]
    %v727 = vld [vmem:[#allocation10 + $0x28] sm:$0xff]
    %v728 = vld [vmem:[#allocation10 + $0x30] sm:$0xff]
    %v729 = vld [vmem:[#allocation10 + $0x38] sm:$0xff]
    %v730 = vld [vmem:[#allocation10 + $0x40] sm:$0xff]
    %v731 = vld [vmem:[#allocation10 + $0x48] sm:$0xff]
    %v732 = vld [vmem:[#allocation10 + $0x50] sm:$0xff]
    %v733 = vld [vmem:[#allocation10 + $0x58] sm:$0xff]
    %v734 = vld [vmem:[#allocation10 + $0x60] sm:$0xff]
    %v735 = vld [vmem:[#allocation10 + $0x68] sm:$0xff]
    %v736 = vld [vmem:[#allocation10 + $0x70] sm:$0xff]
    %v737 = vld [vmem:[#allocation10 + $0x78] sm:$0xff]
    %738 = vmatprep.subr.mxu0 0.0
    %739 = vmatpush1.msra.mxu0 %v722
    %740 = vmatprep.subr.mxu0 0.0
    %741 = vmatpush1.msra.mxu0 %v723
    %742 = vmatprep.subr.mxu0 0.0
    %743 = vmatpush1.msra.mxu0 %v724
    %744 = vmatprep.subr.mxu0 0.0
    %745 = vmatpush1.msra.mxu0 %v725
    %746 = vmatprep.subr.mxu0 0.0
    %747 = vmatpush1.msra.mxu0 %v726
    %748 = vmatprep.subr.mxu0 0.0
    %749 = vmatpush1.msra.mxu0 %v727
    %750 = vmatprep.subr.mxu0 0.0
    %751 = vmatpush1.msra.mxu0 %v728
    %752 = vmatprep.subr.mxu0 0.0
    %753 = vmatpush1.msra.mxu0 %v729
    %754 = vmatprep.subr.mxu0 0.0
    %755 = vmatpush1.msra.mxu0 %v730
    %756 = vmatprep.subr.mxu0 0.0
    %757 = vmatpush1.msra.mxu0 %v731
    %758 = vmatprep.subr.mxu0 0.0
    %759 = vmatpush1.msra.mxu0 %v732
    %760 = vmatprep.subr.mxu0 0.0
    %761 = vmatpush1.msra.mxu0 %v733
    %762 = vmatprep.subr.mxu0 0.0
    %763 = vmatpush1.msra.mxu0 %v734
    %764 = vmatprep.subr.mxu0 0.0
    %765 = vmatpush1.msra.mxu0 %v735
    %766 = vmatprep.subr.mxu0 0.0
    %767 = vmatpush1.msra.mxu0 %v736
    %768 = vmatprep.subr.mxu0 0.0
    %769 = vmatpush1.msra.mxu0 %v737
    %770 = vmatprep.subr.mxu0 0.0
    %771 = vmatpush1.msra.mxu0 0.0
    %772 = vmatprep.subr.mxu0 0.0
    %773 = vmatpush1.msra.mxu0 0.0
    %774 = vmatprep.subr.mxu0 0.0
    %775 = vmatpush1.msra.mxu0 0.0
    %776 = vmatprep.subr.mxu0 0.0
    %777 = vmatpush1.msra.mxu0 0.0
    %778 = vmatprep.subr.mxu0 0.0
    %779 = vmatpush1.msra.mxu0 0.0
    %780 = vmatprep.subr.mxu0 0.0
    %781 = vmatpush1.msra.mxu0 0.0
    %782 = vmatprep.subr.mxu0 0.0
    %783 = vmatpush1.msra.mxu0 0.0
    %784 = vmatprep.subr.mxu0 0.0
    %785 = vmatpush1.msra.mxu0 0.0
    %786 = vmatprep.subr.mxu0 0.0
    %787 = vmatpush1.msra.mxu0 0.0
    %788 = vmatprep.subr.mxu0 0.0
    %789 = vmatpush1.msra.mxu0 0.0
    %790 = vmatprep.subr.mxu0 0.0
    %791 = vmatpush1.msra.mxu0 0.0
    %792 = vmatprep.subr.mxu0 0.0
    %793 = vmatpush1.msra.mxu0 0.0
    %794 = vmatprep.subr.mxu0 0.0
    %795 = vmatpush1.msra.mxu0 0.0
    %796 = vmatprep.subr.mxu0 0.0
    %797 = vmatpush1.msra.mxu0 0.0
    %798 = vmatprep.subr.mxu0 0.0
    %799 = vmatpush1.msra.mxu0 0.0
    %800 = vmatprep.subr.mxu0 0.0
    %801 = vmatpush1.msra.mxu0 0.0
    %802 = vmatprep.mubr.f32.mxu0 0.0
    %803 = vmatmul.mubr.f32.gmra.mrb[0].mxu0 %v720
    %v804 = vpop.f32.mrb[0].mxu0
    %v805 = vadd.f32 0.0, %v804
    %v806 = vpop.f32.mrb[0].mxu0
    %807 = vmatprep.mubr.f32.mxu0 0.0
    %808 = vmatmul.mubr.f32.gmra.mrb[0].mxu0 %v721
    %v809 = vpop.f32.mrb[0].mxu0
    %v810 = vadd.f32 0.0, %v809
    %v811 = vpop.f32.mrb[0].mxu0
    %812 = vdwg.mxu0
    %v813 = vadd.f32 %v457, %v369
    %v814 = vadd.f32 %v461, %v375
    %v815 = vmul.f32 %v805, %v813
    %v816 = vmul.f32 %v810, %v814
    %817 = vmatprep.subr.mxu0 0.0
    %818 = vmatpush1.msra.mxu0 %v815
    %819 = vmatprep.subr.mxu0 0.0
    %820 = vmatpush1.msra.mxu0 %v816
    %821 = vmatprep.subr.mxu0 0.0
    %822 = vmatpush1.msra.mxu0 0.0
    %823 = vmatprep.subr.mxu0 0.0
    %824 = vmatpush1.msra.mxu0 0.0
    %825 = vmatprep.subr.mxu0 0.0
    %826 = vmatpush1.msra.mxu0 0.0
    %827 = vmatprep.subr.mxu0 0.0
    %828 = vmatpush1.msra.mxu0 0.0
    %829 = vmatprep.subr.mxu0 0.0
    %830 = vmatpush1.msra.mxu0 0.0
    %831 = vmatprep.subr.mxu0 0.0
    %832 = vmatpush1.msra.mxu0 0.0
    %833 = vmatprep.subr.mxu0 0.0
    %834 = vmatpush1.msra.mxu0 0.0
    %835 = vmatprep.subr.mxu0 0.0
    %836 = vmatpush1.msra.mxu0 0.0
    %837 = vmatprep.subr.mxu0 0.0
    %838 = vmatpush1.msra.mxu0 0.0
    %839 = vmatprep.subr.mxu0 0.0
    %840 = vmatpush1.msra.mxu0 0.0
    %841 = vmatprep.subr.mxu0 0.0
    %842 = vmatpush1.msra.mxu0 0.0
    %843 = vmatprep.subr.mxu0 0.0
    %844 = vmatpush1.msra.mxu0 0.0
    %845 = vmatprep.subr.mxu0 0.0
    %846 = vmatpush1.msra.mxu0 0.0
    %847 = vmatprep.subr.mxu0 0.0
    %848 = vmatpush1.msra.mxu0 0.0
    %849 = vmatprep.subr.mxu0 0.0
    %850 = vmatpush1.msra.mxu0 0.0
    %851 = vmatprep.subr.mxu0 0.0
    %852 = vmatpush1.msra.mxu0 0.0
    %853 = vmatprep.subr.mxu0 0.0
    %854 = vmatpush1.msra.mxu0 0.0
    %855 = vmatprep.subr.mxu0 0.0
    %856 = vmatpush1.msra.mxu0 0.0
    %857 = vmatprep.subr.mxu0 0.0
    %858 = vmatpush1.msra.mxu0 0.0
    %859 = vmatprep.subr.mxu0 0.0
    %860 = vmatpush1.msra.mxu0 0.0
    %861 = vmatprep.subr.mxu0 0.0
    %862 = vmatpush1.msra.mxu0 0.0
    %863 = vmatprep.subr.mxu0 0.0
    %864 = vmatpush1.msra.mxu0 0.0
    %865 = vmatprep.subr.mxu0 0.0
    %866 = vmatpush1.msra.mxu0 0.0
    %867 = vmatprep.subr.mxu0 0.0
    %868 = vmatpush1.msra.mxu0 0.0
    %869 = vmatprep.subr.mxu0 0.0
    %870 = vmatpush1.msra.mxu0 0.0
    %871 = vmatprep.subr.mxu0 0.0
    %872 = vmatpush1.msra.mxu0 0.0
    %873 = vmatprep.subr.mxu0 0.0
    %874 = vmatpush1.msra.mxu0 0.0
    %875 = vmatprep.subr.mxu0 0.0
    %876 = vmatpush1.msra.mxu0 0.0
    %877 = vmatprep.subr.mxu0 0.0
    %878 = vmatpush1.msra.mxu0 0.0
    %879 = vmatprep.subr.mxu0 0.0
    %880 = vmatpush1.msra.mxu0 0.0
    %881 = vmatprep.mubr.bf16.mxu0 0
    %882 = vmatmul.mubr.bf16.gmra.mrb[0].mxu0 %v571
    %v883 = vpop.f32.mrb[0].mxu0
    %v884 = vadd.f32 0.0, %v883
    %v885 = vpop.f32.mrb[0].mxu0
    %v886 = vpop.f32.mrb[0].mxu0
    %v887 = vpop.f32.mrb[0].mxu0
    %888 = vdwg.mxu0
    %889 = vst [vmem:[#allocation11] sm:$0xff] %v884
    %890 = vst [vmem:[#allocation12] sm:$0xff] %v720
    %891 = vst [vmem:[#allocation12 + $0x8] sm:$0xff] %v721
    // Predicated region
    $region62: #{tpu_custom_call.1} parent=1 // pred_check
      _
    $region63: #{tpu_custom_call.1} parent=1 // pred_check_branch
      %893 = sbr.rel (0) target = $region65
    $region64: #{tpu_custom_call.1} parent=1 // pred_region
      %s895 = ssub.s32 128, 128
      %896 = vsyncadd [#allocation4], %s895
      %s898 = sshll.u32 [#allocation11], 4
      %s899 = int_to_ptr.vmem [resolvable:$true] %s898
      %901 = dma.vmem_to_hbm [thread:$0]  %s899, 128, %s10, [#allocation4]
    $region65: #{tpu_custom_call.1} parent=1 // pred_fallthru
      _
    // Predicated region
    $region66: #{tpu_custom_call.1} parent=1 // pred_check
      _
    $region67: #{tpu_custom_call.1} parent=1 // pred_check_branch
      %903 = sbr.rel (0) target = $region69
    $region68: #{tpu_custom_call.1} parent=1 // pred_region
      %s905 = ssub.s32 256, 256
      %906 = vsyncadd [#allocation13], %s905
      %s907 = sshll.u32 [#allocation12], 4
      %s908 = int_to_ptr.vmem [resolvable:$true] %s907
      %913 = dma.vmem_to_hbm [thread:$0]  %s908, 256, %s11, [#allocation13], 128, 128, 8
    $region69: #{tpu_custom_call.1} parent=1 // pred_fallthru
      _
    // Predicated region
    $region70: #{tpu_custom_call.1} parent=1 // pred_check
      _
    $region71: #{tpu_custom_call.1} parent=1 // pred_check_branch
      %915 = sbr.rel (0) target = $region73
    $region72: #{tpu_custom_call.1} parent=1 // pred_region
      %916 = dma.done [#allocation4], 128
    $region73: #{tpu_custom_call.1} parent=1 // pred_fallthru
      _
    // Predicated region
    $region74: #{tpu_custom_call.1} parent=1 // pred_check
      _
    $region75: #{tpu_custom_call.1} parent=1 // pred_check_branch
      %918 = sbr.rel (0) target = $region77
    $region76: #{tpu_custom_call.1} parent=1 // pred_region
      %919 = dma.done [#allocation13], 256
    $region77: #{tpu_custom_call.1} parent=1 // pred_fallthru
      _
    %920 = vsyncpa [#allocation3], 1
    %921 = vsyncpa [#allocation6], 1
    %922 = vsyncpa [#allocation9], 1
    %923 = vsyncpa [#allocation4], 1
    %924 = vsyncpa [#allocation13], 1

</llo_original>
